<compile_context>
chip_gen: v6e
topology: v6e:2x2x1
jax: 0.10.0
libtpu: 0.0.40
codegen_flags: <defaults>
</compile_context>

<pallas_src>
import jax
import jax.numpy as jnp
from jax.experimental import pallas as pl
from jax.experimental.pallas import tpu as pltpu


# ---------------------------------------------------------------------------
# kernels
# ---------------------------------------------------------------------------

def highway_fused_kernel(x_ref, w_ref, b_ref, o_ref):
    """One fused MXU pass: (tr, E) @ (E, 2E) -> proj|gate columns."""
    x = x_ref[...]                                   # (tr, E), input dtype
    E = x.shape[-1]
    x_mx = x if x.dtype == w_ref.dtype else x.astype(w_ref.dtype)

    acc = jnp.dot(x_mx, w_ref[...], preferred_element_type=jnp.float32)
    acc = acc + b_ref[...]                           # bias kept in f32

    proj = jnp.maximum(acc[:, :E], 0.0)              # relu branch
    gate = jax.nn.sigmoid(acc[:, E:])                # gate branch (exp on EUP)

    xf = x.astype(jnp.float32)
    o_ref[...] = (xf + gate * (proj - xf)).astype(o_ref.dtype)


def highway_col_kernel(x_ref, xc_ref, wp_ref, wg_ref, bp_ref, bg_ref, o_ref):
    """Column-tiled path for large E: two (tr,E)@(E,tn) dots per block."""
    x = x_ref[...]                                   # (tr, E) full-width x
    x_mx = x if x.dtype == wp_ref.dtype else x.astype(wp_ref.dtype)

    proj = jnp.dot(x_mx, wp_ref[...], preferred_element_type=jnp.float32)
    gate = jnp.dot(x_mx, wg_ref[...], preferred_element_type=jnp.float32)
    proj = jnp.maximum(proj + bp_ref[...], 0.0)
    gate = jax.nn.sigmoid(gate + bg_ref[...])

    xf = xc_ref[...].astype(jnp.float32)             # (tr, tn) residual slice
    o_ref[...] = (xf + gate * (proj - xf)).astype(o_ref.dtype)


# ---------------------------------------------------------------------------
# parameter prep (outside the hot path)
# ---------------------------------------------------------------------------

def prepare_highway_params(wp, bp, wg, bg, compute_dtype=jnp.bfloat16):
    """wp, wg: (E, E) PyTorch (out, in); bp, bg: (E,).

    Returns fused weight (E, 2E) in `compute_dtype` (bf16 by default -> native
    MXU dtype on v5e/v6e/v7x) and fused bias (1, 2E) in f32 (added onto the
    f32 accumulator).
    """
    w_fused = jnp.concatenate([wp.T, wg.T], axis=1)            # (E, 2E)
    if compute_dtype is not None:
        w_fused = w_fused.astype(compute_dtype)
    b_fused = jnp.concatenate([bp, bg]).reshape(1, -1).astype(jnp.float32)
    return w_fused, b_fused


# ---------------------------------------------------------------------------
# wrapper
# ---------------------------------------------------------------------------

def _round_up(v, m):
    return ((v + m - 1) // m) * m


def _vmem_capacity_bytes():
    """Generation-aware VMEM capacity (64 MiB v7x, 128 MiB v5e/v6e)."""
    try:
        cap = getattr(pltpu.get_tpu_info(), "vmem_capacity_bytes", None)
        if cap:
            return int(cap)
    except Exception:
        pass
    return 64 * 2**20  # conservative default (v7x per-TC)


def highway_pallas(x, w_fused, b_fused, *, tile_rows=512, out_dtype=None,
                   force_col_tiling=False, col_tile=None):
    """x: (..., E). w_fused: (E, 2E) pre-fused weight. b_fused: (1, 2E) f32."""
    orig_shape = x.shape
    E = orig_shape[-1]
    assert w_fused.shape == (E, 2 * E), "w_fused must be (E, 2E)"
    assert b_fused.shape == (1, 2 * E), "b_fused must be (1, 2E)"
    out_dtype = out_dtype or x.dtype

    x2d = x.reshape(-1, E)                      # no dtype cast: no extra HBM pass
    N = x2d.shape[0]

    # Sublane packing of the actual x tile dtype: 8 (f32), 16 (bf16), 32 (i8).
    x_itemsize = jnp.dtype(x2d.dtype).itemsize
    packing = 8 * max(1, 4 // x_itemsize)

    # Row tile: round caller value to packing; clamp to ~ceil(N/2) so the
    # parallel row axis has >= 2 steps when possible (v7x megacore) and tiny
    # inputs don't over-tile.
    tile_rows = max(packing, _round_up(int(tile_rows), packing))
    tr = max(packing, min(tile_rows, _round_up(pl.cdiv(N, 2), packing)))
    n_row_blocks = pl.cdiv(N, tr)

    vmem_cap = _vmem_capacity_bytes()
    out_itemsize = jnp.dtype(out_dtype).itemsize
    w_itemsize = jnp.dtype(w_fused.dtype).itemsize
    w_bytes = w_fused.size * w_itemsize
    b_bytes = b_fused.size * b_fused.dtype.itemsize

    use_cols = (E % 128 == 0) and (force_col_tiling or w_bytes > 0.35 * vmem_cap)

    if use_cols:
        # ------- large-E path: tile the output columns ---------------------
        tn = col_tile or (256 if E % 256 == 0 else 128)
        assert tn % 128 == 0 and E % tn == 0, "col_tile must divide E, %128==0"
        nc = E // tn                                     # column tiles per branch

        need = (2 * tr * E * x_itemsize          # x full tile (double-buffered)
                + 2 * tr * tn * x_itemsize       # x residual columns
                + 2 * tr * tn * out_itemsize     # output tile
                + 2 * 2 * E * tn * w_itemsize    # Wp/Wg column tiles
                + 2 * 2 * tn * 4                 # bias tiles
                + 3 * tr * tn * 4)               # f32 intermediates
        vmem_limit = int(min(0.8 * vmem_cap, max(32 * 2**20, 2 * need)))

        out2d = pl.pallas_call(
            highway_col_kernel,
            out_shape=jax.ShapeDtypeStruct((N, E), out_dtype),
            grid_spec=pltpu.PrefetchScalarGridSpec(
                num_scalar_prefetch=0,
                grid=(n_row_blocks, nc),
                in_specs=[
                    pl.BlockSpec((tr, E), lambda i, j: (i, 0)),       # x (GEMM)
                    pl.BlockSpec((tr, tn), lambda i, j: (i, j)),      # x residual
                    pl.BlockSpec((E, tn), lambda i, j: (0, j)),       # Wp^T cols
                    pl.BlockSpec((E, tn), lambda i, j: (0, j + nc)),  # Wg^T cols
                    pl.BlockSpec((1, tn), lambda i, j: (0, j)),       # bp cols
                    pl.BlockSpec((1, tn), lambda i, j: (0, j + nc)),  # bg cols
                ],
                out_specs=pl.BlockSpec((tr, tn), lambda i, j: (i, j)),
            ),
            compiler_params=pltpu.CompilerParams(
                dimension_semantics=("parallel", "arbitrary"),
                vmem_limit_bytes=vmem_limit,
            ),
        )(x2d, x2d, w_fused, w_fused, b_fused, b_fused)
        return out2d.reshape(orig_shape)

    # ------- default path: single fused GEMM, weight VMEM-resident ---------
    need_base = (2 * tr * E * x_itemsize          # x tile (double-buffered)
                 + 2 * tr * E * out_itemsize      # output tile
                 + tr * 2 * E * 4)                # f32 accumulator

    def run(single_buffer):
        def inv_spec(shape):
            # Grid-invariant operand: fetched once; single-buffer to halve its
            # resident footprint (matters most on v7x's 64 MiB VMEM).
            if single_buffer:
                return pl.BlockSpec(shape, lambda i: (0, 0),
                                    pipeline_mode=pl.Buffered(1))
            return pl.BlockSpec(shape, lambda i: (0, 0))

        w_buf = 1 if single_buffer else 2
        need = need_base + w_buf * (w_bytes + b_bytes)
        vmem_limit = int(min(0.8 * vmem_cap, max(32 * 2**20, 2 * need)))

        return pl.pallas_call(
            highway_fused_kernel,
            out_shape=jax.ShapeDtypeStruct((N, E), out_dtype),
            grid_spec=pltpu.PrefetchScalarGridSpec(
                num_scalar_prefetch=0,
                grid=(n_row_blocks,),
                in_specs=[
                    pl.BlockSpec((tr, E), lambda i: (i, 0)),   # x row tile
                    inv_spec((E, 2 * E)),                      # fused W (resident)
                    inv_spec((1, 2 * E)),                      # fused bias
                ],
                out_specs=pl.BlockSpec((tr, E), lambda i: (i, 0)),
            ),
            compiler_params=pltpu.CompilerParams(
                dimension_semantics=("parallel",),
                vmem_limit_bytes=vmem_limit,
            ),
        )(x2d, w_fused, b_fused)

    try:
        out2d = run(single_buffer=True)
    except Exception:
        # pl.Buffered(1) unsupported on this JAX build -> default buffering.
        out2d = run(single_buffer=False)
    return out2d.reshape(orig_shape)


# ---------------------------------------------------------------------------
# pure-JAX reference (PyTorch nn.Linear convention)
# ---------------------------------------------------------------------------

def highway_ref(x, wp, bp, wg, bg):
    proj = jax.nn.relu(jnp.einsum("...i,oi->...o", x, wp) + bp)
    gate = jax.nn.sigmoid(jnp.einsum("...i,oi->...o", x, wg) + bg)
    return proj * gate + (1.0 - gate) * x


if __name__ == "__main__":
    key = jax.random.PRNGKey(0)

    def make_params(k, embed):
        k_wp, k_bp, k_wg, k_bg = jax.random.split(k, 4)
        scale = 1.0 / jnp.sqrt(embed)
        wp = jax.random.uniform(k_wp, (embed, embed), minval=-scale, maxval=scale)
        bp = jax.random.uniform(k_bp, (embed,), minval=-scale, maxval=scale)
        wg = jax.random.uniform(k_wg, (embed, embed), minval=-scale, maxval=scale)
        bg = jax.random.uniform(k_bg, (embed,), minval=-scale, maxval=scale)
        return wp, bp, wg, bg

    # --- check 1: small embed, fused single-GEMM path (bf16 MXU) ----------
    batch, seq, embed = 2, 8, 32
    k_x, k_p, key = jax.random.split(key, 3)
    x = jax.random.normal(k_x, (batch, seq, embed), dtype=jnp.float32)
    wp, bp, wg, bg = make_params(k_p, embed)
    w_fused, b_fused = prepare_highway_params(wp, bp, wg, bg)   # bf16 weights
    out = highway_pallas(x, w_fused, b_fused)
    jax.block_until_ready(out)
    ref = highway_ref(x, wp, bp, wg, bg)
    assert out.shape == x.shape and out.dtype == x.dtype
    assert jnp.allclose(out, ref, atol=3e-2, rtol=3e-2), "fused path mismatch"

    # --- check 2: larger embed + ragged rows, column-tiled path ------------
    batch, seq, embed = 2, 9, 256            # N=18 -> exercises ragged last block
    k_x, k_p, key = jax.random.split(key, 3)
    x = jax.random.normal(k_x, (batch, seq, embed), dtype=jnp.float32)
    wp, bp, wg, bg = make_params(k_p, embed)
    w_fused, b_fused = prepare_highway_params(wp, bp, wg, bg)
    out = highway_pallas(x, w_fused, b_fused, force_col_tiling=True, col_tile=128)
    jax.block_until_ready(out)
    ref = highway_ref(x, wp, bp, wg, bg)
    assert out.shape == x.shape
    assert jnp.allclose(out, ref, atol=3e-2, rtol=3e-2), "col-tiled path mismatch"

    print("KERNEL_OK")
</pallas_src>

<mosaic_0001>
module attributes {stable_mosaic.version = 11 : i64} {
  func.func @highway_fused_kernel(%arg0: i32, %arg1: memref<8x32xf32, #tpu.memory_space<vmem>>, %arg2: memref<32x64xbf16, #tpu.memory_space<vmem>>, %arg3: memref<1x64xf32, #tpu.memory_space<vmem>>, %arg4: memref<8x32xf32, #tpu.memory_space<vmem>>) attributes {dimension_semantics = [#tpu.dimension_semantics<parallel>], iteration_bounds = array<i64: 2>, scalar_prefetch = 0 : i64, scratch_operands = 0 : i64, tpu.core_type = #tpu.core_type<tc>, window_params = [{transform_indices = @transform_0, window_bounds = array<i64: 8, 32>}, {pipeline_mode = #tpu.pipeline_mode<synchronous>, transform_indices = @transform_1, window_bounds = array<i64: 32, 64>}, {pipeline_mode = #tpu.pipeline_mode<synchronous>, transform_indices = @transform_2, window_bounds = array<i64: 1, 64>}, {transform_indices = @transform_3, window_bounds = array<i64: 8, 32>}]} {
    %c0 = arith.constant 0 : index
    %c0_0 = arith.constant 0 : index
    %0 = vector.load %arg1[%c0, %c0_0] : memref<8x32xf32, #tpu.memory_space<vmem>>, vector<8x32xf32>
    %1 = arith.truncf %0 : vector<8x32xf32> to vector<8x32xbf16>
    %c0_1 = arith.constant 0 : index
    %c0_2 = arith.constant 0 : index
    %2 = vector.load %arg2[%c0_1, %c0_2] : memref<32x64xbf16, #tpu.memory_space<vmem>>, vector<32x64xbf16>
    %cst = arith.constant dense<0.000000e+00> : vector<8x64xf32>
    %3 = tpu.matmul %1, %2, %cst {dimension_numbers = #tpu.dot_dimension_numbers<[1], [0], [0], [1], [0, 0, 1, 1], [], []>} : vector<8x32xbf16>, vector<32x64xbf16>, vector<8x64xf32> -> vector<8x64xf32>
    %c0_3 = arith.constant 0 : index
    %c0_4 = arith.constant 0 : index
    %4 = vector.load %arg3[%c0_3, %c0_4] : memref<1x64xf32, #tpu.memory_space<vmem>>, vector<1x64xf32>
    %5 = vector.broadcast %4 : vector<1x64xf32> to vector<8x64xf32>
    %6 = arith.addf %3, %5 : vector<8x64xf32>
    %7 = vector.extract_strided_slice %6 {offsets = [0, 0], sizes = [8, 32], strides = [1, 1]} : vector<8x64xf32> to vector<8x32xf32>
    %cst_5 = arith.constant 0.000000e+00 : f32
    %8 = vector.broadcast %cst_5 : f32 to vector<8x32xf32>
    %9 = arith.maximumf %7, %8 : vector<8x32xf32>
    %10 = vector.extract_strided_slice %6 {offsets = [0, 32], sizes = [8, 32], strides = [1, 1]} : vector<8x64xf32> to vector<8x32xf32>
    %11 = arith.negf %10 : vector<8x32xf32>
    %12 = math.exp %11 : vector<8x32xf32>
    %cst_6 = arith.constant 1.000000e+00 : f32
    %13 = vector.broadcast %cst_6 : f32 to vector<8x32xf32>
    %14 = arith.addf %13, %12 : vector<8x32xf32>
    %15 = arith.divf %13, %14 : vector<8x32xf32>
    %16 = arith.subf %9, %0 : vector<8x32xf32>
    %17 = arith.mulf %15, %16 : vector<8x32xf32>
    %18 = arith.addf %0, %17 : vector<8x32xf32>
    %c0_7 = arith.constant 0 : index
    %c0_8 = arith.constant 0 : index
    %19 = vector.load %arg4[%c0_7, %c0_8] : memref<8x32xf32, #tpu.memory_space<vmem>>, vector<8x32xf32>
    tpu.vector_store %arg4[%c0_7, %c0_8], %18 {strides = array<i32>} : memref<8x32xf32, #tpu.memory_space<vmem>>, vector<8x32xf32>,
    return
  }
  func.func @transform_0(%arg0: i32) -> (i32, i32) {
    %c0_i32 = arith.constant 0 : i32
    %c0_i32_0 = arith.constant 0 : i32
    return %arg0, %c0_i32 : i32, i32
  }
  func.func @transform_1(%arg0: i32) -> (i32, i32) {
    %c0_i32 = arith.constant 0 : i32
    %c0_i32_0 = arith.constant 0 : i32
    %c0_i32_1 = arith.constant 0 : i32
    return %c0_i32, %c0_i32_0 : i32, i32
  }
  func.func @transform_2(%arg0: i32) -> (i32, i32) {
    %c0_i32 = arith.constant 0 : i32
    %c0_i32_0 = arith.constant 0 : i32
    %c0_i32_1 = arith.constant 0 : i32
    return %c0_i32, %c0_i32_0 : i32, i32
  }
  func.func @transform_3(%arg0: i32) -> (i32, i32) {
    %c0_i32 = arith.constant 0 : i32
    %c0_i32_0 = arith.constant 0 : i32
    return %arg0, %c0_i32 : i32, i32
  }
}

module attributes {stable_mosaic.version = 11 : i64} {
  func.func @highway_fused_kernel(%arg0: i32, %arg1: memref<8x32xf32, #tpu.memory_space<vmem>>, %arg2: memref<32x64xbf16, #tpu.memory_space<vmem>>, %arg3: memref<1x64xf32, #tpu.memory_space<vmem>>, %arg4: memref<8x32xf32, #tpu.memory_space<vmem>>) attributes {dimension_semantics = [#tpu.dimension_semantics<parallel>], iteration_bounds = array<i64: 2>, scalar_prefetch = 0 : i64, scratch_operands = 0 : i64, tpu.core_type = #tpu.core_type<tc>, window_params = [{transform_indices = @transform_0, window_bounds = array<i64: 8, 32>}, {pipeline_mode = #tpu.pipeline_mode<synchronous>, transform_indices = @transform_1, window_bounds = array<i64: 32, 64>}, {pipeline_mode = #tpu.pipeline_mode<synchronous>, transform_indices = @transform_2, window_bounds = array<i64: 1, 64>}, {transform_indices = @transform_3, window_bounds = array<i64: 8, 32>}]} {
    %c0 = arith.constant 0 : index
    %c0_0 = arith.constant 0 : index
    %0 = vector.load %arg1[%c0, %c0_0] : memref<8x32xf32, #tpu.memory_space<vmem>>, vector<8x32xf32>
    %1 = arith.truncf %0 : vector<8x32xf32> to vector<8x32xbf16>
    %c0_1 = arith.constant 0 : index
    %c0_2 = arith.constant 0 : index
    %2 = vector.load %arg2[%c0_1, %c0_2] : memref<32x64xbf16, #tpu.memory_space<vmem>>, vector<32x64xbf16>
    %cst = arith.constant dense<0.000000e+00> : vector<8x64xf32>
    %3 = tpu.matmul %1, %2, %cst {dimension_numbers = #tpu.dot_dimension_numbers<[1], [0], [0], [1], [0, 0, 1, 1], [], []>} : vector<8x32xbf16>, vector<32x64xbf16>, vector<8x64xf32> -> vector<8x64xf32>
    %c0_3 = arith.constant 0 : index
    %c0_4 = arith.constant 0 : index
    %4 = vector.load %arg3[%c0_3, %c0_4] : memref<1x64xf32, #tpu.memory_space<vmem>>, vector<1x64xf32>
    %5 = vector.broadcast %4 : vector<1x64xf32> to vector<8x64xf32>
    %6 = arith.addf %3, %5 : vector<8x64xf32>
    %7 = vector.extract_strided_slice %6 {offsets = [0, 0], sizes = [8, 32], strides = [1, 1]} : vector<8x64xf32> to vector<8x32xf32>
    %cst_5 = arith.constant 0.000000e+00 : f32
    %8 = vector.broadcast %cst_5 : f32 to vector<8x32xf32>
    %9 = arith.maximumf %7, %8 : vector<8x32xf32>
    %10 = vector.extract_strided_slice %6 {offsets = [0, 32], sizes = [8, 32], strides = [1, 1]} : vector<8x64xf32> to vector<8x32xf32>
    %11 = arith.negf %10 : vector<8x32xf32>
    %12 = math.exp %11 : vector<8x32xf32>
    %cst_6 = arith.constant 1.000000e+00 : f32
    %13 = vector.broadcast %cst_6 : f32 to vector<8x32xf32>
    %14 = arith.addf %13, %12 : vector<8x32xf32>
    %15 = arith.divf %13, %14 : vector<8x32xf32>
    %16 = arith.subf %9, %0 : vector<8x32xf32>
    %17 = arith.mulf %15, %16 : vector<8x32xf32>
    %18 = arith.addf %0, %17 : vector<8x32xf32>
    %c0_7 = arith.constant 0 : index
    %c0_8 = arith.constant 0 : index
    %19 = vector.load %arg4[%c0_7, %c0_8] : memref<8x32xf32, #tpu.memory_space<vmem>>, vector<8x32xf32>
    tpu.vector_store %arg4[%c0_7, %c0_8], %18 {strides = array<i32>} : memref<8x32xf32, #tpu.memory_space<vmem>>, vector<8x32xf32>,
    return
  }
  func.func @transform_0(%arg0: i32) -> (i32, i32) {
    %c0_i32 = arith.constant 0 : i32
    %c0_i32_0 = arith.constant 0 : i32
    return %arg0, %c0_i32 : i32, i32
  }
  func.func @transform_1(%arg0: i32) -> (i32, i32) {
    %c0_i32 = arith.constant 0 : i32
    %c0_i32_0 = arith.constant 0 : i32
    %c0_i32_1 = arith.constant 0 : i32
    return %c0_i32, %c0_i32_0 : i32, i32
  }
  func.func @transform_2(%arg0: i32) -> (i32, i32) {
    %c0_i32 = arith.constant 0 : i32
    %c0_i32_0 = arith.constant 0 : i32
    %c0_i32_1 = arith.constant 0 : i32
    return %c0_i32, %c0_i32_0 : i32, i32
  }
  func.func @transform_3(%arg0: i32) -> (i32, i32) {
    %c0_i32 = arith.constant 0 : i32
    %c0_i32_0 = arith.constant 0 : i32
    return %arg0, %c0_i32 : i32, i32
  }
}

</mosaic_0001>

<llo_original>
// kernel: tpu_custom_call.1
$region0: #{tpu_custom_call.1}
  #allocation0 [shape = 'u32[]', space=smem, size = 0x4, offset = 0x4, fixed_abs, tag = 'smem constant byte address 0x4 - core index']
  #allocation1 [shape = 'u32[144,128]{1,0:T(1,128)}', space=vmem, size = 0x12000, scoped, tag = 'internal scratch']
  %s0 = inlined_call_operand.hbm [shape: f32[16,32], index: 0, kind: input, shape index: {}]
  %s1 = inlined_call_operand.hbm [shape: bf16[32,64], index: 1, kind: input, shape index: {}]
  %s2 = inlined_call_operand.vmem [shape: f32[1,64], index: 2, kind: input, shape index: {}]
  %s3 = inlined_call_operand.hbm [shape: f32[16,32], index: 3, kind: output, shape index: {}]
  %s4 = sld [smem:[#allocation0]]
  $region53: #{tpu_custom_call.1} parent=0
    _
  %s6 = ssub.s32 1, %s4
  %s7 = scalar_select 0, %s6, %s4
  $region1: #{tpu_custom_call.1} parent=0
    #allocation2 [shape = 'u8[8192]{0}', space=vmem, size = 0x2000, scoped, tag = 'input window, operand 0']
    #allocation3 [shape = 's32[2]{0}', space=sflag, size = 0x8, scoped, tag = 'scoped memory for tpu_custom_call.1']
    #allocation4 [shape = 's32[2]{0}', space=sflag, size = 0x8, scoped, tag = 'scoped memory for tpu_custom_call.1']
    #allocation5 [shape = 'u8[8192]{0}', space=vmem, size = 0x2000, scoped, tag = 'input window, operand 1, single buffered']
    #allocation6 [shape = 's32[1]{0}', space=sflag, size = 0x4, scoped, tag = 'scoped memory for tpu_custom_call.1']
    #allocation7 [shape = 'u8[8192]{0}', space=vmem, size = 0x2000, scoped, tag = 'output window, operand 0']
    %8 = vsyncpa [#allocation3], 0
    %s9 = scalar_lea.sflag [#allocation3], 1
    %10 = vsyncpa %s9, 0
    %11 = vsyncpa [#allocation6], 0
    %12 = vsyncpa [#allocation4], 0
    %s13 = scalar_lea.sflag [#allocation4], 1
    %14 = vsyncpa %s13, 0
    loop: start=0, step=1, limit=4
    $region2: #{tpu_custom_call.1} parent=1 // loop_pre_header
      _
    $region3: #{tpu_custom_call.1} parent=1 // loop_header
      %s16 = sphi 0, %s20
      %p17 = scmp.ge.s32.totalorder %s16, 4
      %s26 = sphi 0, %s28
      %s29 = sphi 0, %s26
      %s30 = sphi 0, %s29
      %s46 = sphi 0, %s30
      %s50 = sphi 0, %s50
      %s52 = sphi 0, %s50
      %s53 = sphi 0, %s52
      %s67 = sphi 0, %s53
      %s71 = sphi 0, %s71
      %s73 = sphi 0, %s71
      %s74 = sphi 0, %s73
      %s88 = sphi 0, %s74
      %s94 = sphi 0, %s96
      %s97 = sphi 0, %s94
      %s98 = sphi 0, %s97
      %s114 = sphi 0, %s98
    $region4: #{tpu_custom_call.1} parent=1 // loop_header_branch
      %19 = sbr.rel (%p17) target = $region8
    $region5: #{tpu_custom_call.1} parent=1 // loop_body
      %s21 = ssub.s32 %s16, 1
      %s22 = ssub.s32 %s16, 2
      %s23 = sadd.s32 %s16, 1
      %s24 = ssub.s32 %s16, %s23
      %p25 = scmp.eq.s32.totalorder %s24, 0
      %s27 = sadd.s32 %s26, 1
      %s28 = scalar_select %p25, %s26, %s27
      %p31 = pneg %p25
      %p32 = scmp.eq.s32.totalorder %s16, 1
      %p33 = por %p31, %p32
      %p34 = scmp.ne.s32.totalorder %s26, %s29
      %p35 = scmp.eq.s32.totalorder %s16, 0
      %p36 = por %p34, %p35
      %p37 = scmp.ne.s32.totalorder %s26, %s29
      %p38 = scmp.eq.s32.totalorder %s21, 1
      %p39 = por %p37, %p38
      %p40 = scmp.ne.s32.totalorder %s29, %s30
      %p41 = scmp.eq.s32.totalorder %s21, 0
      %p42 = por %p40, %p41
      %p43 = scmp.ne.s32.totalorder %s29, %s30
      %p44 = scmp.eq.s32.totalorder %s22, 1
      %p45 = por %p43, %p44
      %p47 = scmp.ne.s32.totalorder %s30, %s46
      %p48 = scmp.eq.s32.totalorder %s22, 0
      %p49 = por %p47, %p48
      %s51 = sadd.s32 %s50, 1
      %p54 = scmp.eq.s32.totalorder %s16, 1
      %p55 = scmp.ne.s32.totalorder %s50, %s52
      %p56 = scmp.eq.s32.totalorder %s16, 0
      %p57 = por %p55, %p56
      %p58 = scmp.ne.s32.totalorder %s50, %s52
      %p59 = scmp.eq.s32.totalorder %s21, 1
      %p60 = por %p58, %p59
      %p61 = scmp.ne.s32.totalorder %s52, %s53
      %p62 = scmp.eq.s32.totalorder %s21, 0
      %p63 = por %p61, %p62
      %p64 = scmp.ne.s32.totalorder %s52, %s53
      %p65 = scmp.eq.s32.totalorder %s22, 1
      %p66 = por %p64, %p65
      %p68 = scmp.ne.s32.totalorder %s53, %s67
      %p69 = scmp.eq.s32.totalorder %s22, 0
      %p70 = por %p68, %p69
      %s72 = sadd.s32 %s71, 1
      %p75 = scmp.eq.s32.totalorder %s16, 1
      %p76 = scmp.ne.s32.totalorder %s71, %s73
      %p77 = scmp.eq.s32.totalorder %s16, 0
      %p78 = por %p76, %p77
      %p79 = scmp.ne.s32.totalorder %s71, %s73
      %p80 = scmp.eq.s32.totalorder %s21, 1
      %p81 = por %p79, %p80
      %p82 = scmp.ne.s32.totalorder %s73, %s74
      %p83 = scmp.eq.s32.totalorder %s21, 0
      %p84 = por %p82, %p83
      %p85 = scmp.ne.s32.totalorder %s73, %s74
      %p86 = scmp.eq.s32.totalorder %s22, 1
      %p87 = por %p85, %p86
      %p89 = scmp.ne.s32.totalorder %s74, %s88
      %p90 = scmp.eq.s32.totalorder %s22, 0
      %p91 = por %p89, %p90
      %s92 = ssub.s32 %s16, %s23
      %p93 = scmp.eq.s32.totalorder %s92, 0
      %s95 = sadd.s32 %s94, 1
      %s96 = scalar_select %p93, %s94, %s95
      %p99 = pneg %p93
      %p100 = scmp.eq.s32.totalorder %s16, 1
      %p101 = por %p99, %p100
      %p102 = scmp.ne.s32.totalorder %s94, %s97
      %p103 = scmp.eq.s32.totalorder %s16, 0
      %p104 = por %p102, %p103
      %p105 = scmp.ne.s32.totalorder %s94, %s97
      %p106 = scmp.eq.s32.totalorder %s21, 1
      %p107 = por %p105, %p106
      %p108 = scmp.ne.s32.totalorder %s97, %s98
      %p109 = scmp.eq.s32.totalorder %s21, 0
      %p110 = por %p108, %p109
      %p111 = scmp.ne.s32.totalorder %s97, %s98
      %p112 = scmp.eq.s32.totalorder %s22, 1
      %p113 = por %p111, %p112
      %p115 = scmp.ne.s32.totalorder %s98, %s114
      %p116 = scmp.eq.s32.totalorder %s22, 0
      %p117 = por %p115, %p116
      %p118 = scmp.le.s32.totalorder 1, %s16
      %p119 = scmp.lt.s32.totalorder %s16, 3
      %p120 = pnand %p118, %p119
      %p121 = pneg %p120
      // Predicated region
      $region9: #{tpu_custom_call.1} parent=5 // pred_check
        _
      $region10: #{tpu_custom_call.1} parent=5 // pred_check_branch
        %123 = sbr.rel (%p120) target = $region12
      $region11: #{tpu_custom_call.1} parent=5 // pred_region
        %s124 = ssub.s32 %s16, 1
        // Predicated region
        $region13: #{tpu_custom_call.1} parent=11 // pred_check
          %p125 = pneg %p63
        $region14: #{tpu_custom_call.1} parent=11 // pred_check_branch
          %127 = sbr.rel (%p125) target = $region16
        $region15: #{tpu_custom_call.1} parent=11 // pred_region
          %s129 = ssub.s32 256, 256
          %130 = vsyncadd [#allocation6], %s129
          %s131 = sshll.u32 [#allocation5], 4
          %s132 = int_to_ptr.vmem [resolvable:$true] %s131
          %137 = dma.hbm_to_vmem [thread:$0]  %s1, 256, %s132, [#allocation6], 64, 64, 4
        $region16: #{tpu_custom_call.1} parent=11 // pred_fallthru
          _
        // Predicated region
        $region17: #{tpu_custom_call.1} parent=11 // pred_check
          %p138 = pneg %p84
        $region18: #{tpu_custom_call.1} parent=11 // pred_check_branch
          %140 = sbr.rel (%p138) target = $region20
        $region19: #{tpu_custom_call.1} parent=11 // pred_region
          _
        $region20: #{tpu_custom_call.1} parent=11 // pred_fallthru
          _
      $region12: #{tpu_custom_call.1} parent=5 // pred_fallthru
        _
      %p141 = scmp.lt.s32.totalorder %s16, 2
      // Predicated region
      $region21: #{tpu_custom_call.1} parent=5 // pred_check
        %p142 = pneg %p141
      $region22: #{tpu_custom_call.1} parent=5 // pred_check_branch
        %144 = sbr.rel (%p142) target = $region24
      $region23: #{tpu_custom_call.1} parent=5 // pred_region
        // Predicated region
        $region25: #{tpu_custom_call.1} parent=23 // pred_check
          %p145 = pneg %p36
        $region26: #{tpu_custom_call.1} parent=23 // pred_check_branch
          %147 = sbr.rel (%p145) target = $region28
        $region27: #{tpu_custom_call.1} parent=23 // pred_region
          %s148 = sand.u32 %s26, 1
          %s149 = scalar_lea.sflag [#allocation3], %s148
          %s150 = sand.u32 %s26, 1
          %s151 = smul.addr %s150, 8
          %s152 = scalar_lea.vmem [#allocation2], %s151
          %s154 = ssub.s32 128, 128
          %155 = vsyncadd %s149, %s154
          %s156 = smul.addr %s16, 128
          %s157 = scalar_lea.hbm %s0, %s156
          %s159 = sshll.u32 %s152, 4
          %s160 = int_to_ptr.vmem [resolvable:$true] %s159
          %162 = dma.hbm_to_vmem [thread:$0]  %s157, 128, %s160, %s149
        $region28: #{tpu_custom_call.1} parent=23 // pred_fallthru
          _
      $region24: #{tpu_custom_call.1} parent=5 // pred_fallthru
        _
      %p163 = scmp.le.s32.totalorder 1, %s16
      %p164 = scmp.lt.s32.totalorder %s16, 3
      %p165 = pnand %p163, %p164
      %p166 = pneg %p165
      // Predicated region
      $region29: #{tpu_custom_call.1} parent=5 // pred_check
        _
      $region30: #{tpu_custom_call.1} parent=5 // pred_check_branch
        %168 = sbr.rel (%p165) target = $region32
      $region31: #{tpu_custom_call.1} parent=5 // pred_region
        %s169 = ssub.s32 %s16, 1
        %s170 = sand.u32 %s29, 1
        %s171 = scalar_lea.sflag [#allocation3], %s170
        %s172 = sand.u32 %s29, 1
        %s173 = smul.addr %s172, 8
        %s174 = scalar_lea.vmem [#allocation2], %s173
        // Predicated region
        $region33: #{tpu_custom_call.1} parent=31 // pred_check
          %p175 = pneg %p42
        $region34: #{tpu_custom_call.1} parent=31 // pred_check_branch
          %177 = sbr.rel (%p175) target = $region36
        $region35: #{tpu_custom_call.1} parent=31 // pred_region
          %178 = dma.done %s171, 128
        $region36: #{tpu_custom_call.1} parent=31 // pred_fallthru
          _
        // Predicated region
        $region37: #{tpu_custom_call.1} parent=31 // pred_check
          %p179 = pneg %p63
        $region38: #{tpu_custom_call.1} parent=31 // pred_check_branch
          %181 = sbr.rel (%p179) target = $region40
        $region39: #{tpu_custom_call.1} parent=31 // pred_region
          %182 = dma.done [#allocation6], 256
        $region40: #{tpu_custom_call.1} parent=31 // pred_fallthru
          _
        %s183 = sand.u32 %s29, 1
        %s184 = scalar_lea.sflag [#allocation3], %s183
        %s185 = sand.u32 %s29, 1
        %s186 = smul.addr %s185, 8
        %s187 = scalar_lea.vmem [#allocation2], %s186
        %p188 = pneg %p42
        %p189 = pneg %p39
        %p190 = pneg %p63
        %p191 = pneg %p60
        %p192 = pneg %p84
        %p193 = pneg %p81
        %p194 = pneg %p110
        %p195 = pneg %p107
        %s196 = sand.u32 %s97, 1
        %s197 = scalar_lea.sflag [#allocation4], %s196
        %s198 = sand.u32 %s97, 1
        %s199 = smul.addr %s198, 8
        %s200 = scalar_lea.vmem [#allocation7], %s199
        %v202 = vld [vmem:[%s174] sm:$0xff]
        %v203 = vpack.c.bf16 %v202, %v202
        %v204 = vld [vmem:[#allocation5] sm:$0xf]
        %v205 = vld [vmem:[#allocation5 + $0x4] sm:$0xf]
        %v206 = vld [vmem:[#allocation5 + $0x8] sm:$0xf]
        %v207 = vld [vmem:[#allocation5 + $0xc] sm:$0xf]
        %v208 = vld [vmem:[%s2] sm:$0x1]
        %v210 = vlaneseq
        %v211 = vshrl.u32 %v210, 7
        %v212 = vsub.s32 0, %v211
        %v213 = vrot.slane %v208, %v212
        %v219 = vunpack.c.l.b16 %v204
        %v220 = vunpack.c.l.b16 %v205
        %v221 = vunpack.c.l.b16 %v206
        %v222 = vunpack.c.l.b16 %v207
        %v223 = vpack.c.b16 %v220, %v219
        %v224 = vpack.c.b16 %v222, %v221
        %vm227 = vcmask 261120
        %v229 = vsel %vm227, %v203, 0
        %231 = vmatprep.subr.bf16.mxu0 0
        %232 = vmatpush1.bf16.msra.mxu0 0
        %233 = vmatprep.subr.bf16.mxu0 0
        %234 = vmatpush1.bf16.msra.mxu0 0
        %235 = vmatprep.subr.bf16.mxu0 0
        %236 = vmatpush1.bf16.msra.mxu0 0
        %237 = vmatprep.subr.bf16.mxu0 0
        %238 = vmatpush1.bf16.msra.mxu0 0
        %239 = vmatprep.subr.bf16.mxu0 0
        %240 = vmatpush1.bf16.msra.mxu0 0
        %241 = vmatprep.subr.bf16.mxu0 0
        %242 = vmatpush1.bf16.msra.mxu0 0
        %243 = vmatprep.subr.bf16.mxu0 0
        %244 = vmatpush1.bf16.msra.mxu0 %v224
        %245 = vmatprep.subr.bf16.mxu0 0
        %246 = vmatpush1.bf16.msra.mxu0 %v223
        %247 = vmatprep.subr.bf16.mxu0 0
        %248 = vmatpush2.bf16.msra.mxu0 0
        %249 = vmatprep.subr.bf16.mxu0 0
        %250 = vmatpush2.bf16.msra.mxu0 0
        %251 = vmatprep.subr.bf16.mxu0 0
        %252 = vmatpush2.bf16.msra.mxu0 0
        %253 = vmatprep.subr.bf16.mxu0 0
        %254 = vmatpush2.bf16.msra.mxu0 0
        %255 = vmatprep.subr.bf16.mxu0 0
        %256 = vmatpush2.bf16.msra.mxu0 0
        %257 = vmatprep.subr.bf16.mxu0 0
        %258 = vmatpush2.bf16.msra.mxu0 0
        %259 = vmatprep.subr.bf16.mxu0 0
        %260 = vmatpush2.bf16.msra.mxu0 0
        %261 = vmatprep.subr.bf16.mxu0 0
        %262 = vmatpush2.bf16.msra.mxu0 0
        %263 = vmatprep.mubr.bf16.mxu0 0
        %264 = vmatmul.mubr.bf16.gmra.mxu0 %v229
        %v265 = vpop.f32.mrf.mxu0
        %v266 = vadd.f32 %v213, %v265
        %v267 = vpop.f32.mrf.mxu0
        %v268 = vpop.f32.mrf.mxu0
        %v269 = vpop.f32.mrf.mxu0
        %270 = vdwg.mxu0
        %v271 = vmax.f32 %v266, 0.0
        %v272 = vxor.u32 %v266, 2147483648
        %v273 = vmul.f32 %v272, 1.442695
        %v274 = vpow.pop %v273
        %v275 = vadd.f32 %v274, 1.0
        %v276 = vrcp.pop %v275
        %v277 = vmul.f32 1.0, %v276
        %v278 = vsub.f32 %v271, %v202
        %280 = vrot.lane.b32.xlu0 %v278, 32
        %v281 = vpop.permute.xlu0 %280
        %v283 = vmul.f32 %v277, %v281
        %285 = vrot.lane.b32.xlu0 %v283, 96
        %v286 = vpop.permute.xlu0 %285
        %v288 = vadd.f32 %v202, %v286
        %289 = vst.msk [vmem:[%s200] sm:$0xff] %vm227, %v288
        %s290 = sand.u32 %s97, 1
        %s291 = scalar_lea.sflag [#allocation4], %s290
        %s292 = sand.u32 %s97, 1
        %s293 = smul.addr %s292, 8
        %s294 = scalar_lea.vmem [#allocation7], %s293
        // Predicated region
        $region41: #{tpu_custom_call.1} parent=31 // pred_check
          %p295 = pneg %p107
        $region42: #{tpu_custom_call.1} parent=31 // pred_check_branch
          %297 = sbr.rel (%p295) target = $region44
        $region43: #{tpu_custom_call.1} parent=31 // pred_region
          %s299 = ssub.s32 128, 128
          %300 = vsyncadd %s291, %s299
          %s301 = smul.addr %s21, 128
          %s302 = scalar_lea.hbm %s3, %s301
          %s304 = sshll.u32 %s294, 4
          %s305 = int_to_ptr.vmem [resolvable:$true] %s304
          %307 = dma.vmem_to_hbm [thread:$0]  %s305, 128, %s302, %s291
        $region44: #{tpu_custom_call.1} parent=31 // pred_fallthru
          _
      $region32: #{tpu_custom_call.1} parent=5 // pred_fallthru
        _
      %p308 = scmp.le.s32.totalorder 2, %s16
      // Predicated region
      $region45: #{tpu_custom_call.1} parent=5 // pred_check
        %p309 = pneg %p308
      $region46: #{tpu_custom_call.1} parent=5 // pred_check_branch
        %311 = sbr.rel (%p309) target = $region48
      $region47: #{tpu_custom_call.1} parent=5 // pred_region
        %s312 = ssub.s32 %s16, 2
        // Predicated region
        $region49: #{tpu_custom_call.1} parent=47 // pred_check
          %p313 = pneg %p113
        $region50: #{tpu_custom_call.1} parent=47 // pred_check_branch
          %315 = sbr.rel (%p313) target = $region52
        $region51: #{tpu_custom_call.1} parent=47 // pred_region
          %s316 = sand.u32 %s98, 1
          %s317 = scalar_lea.sflag [#allocation4], %s316
          %s318 = sand.u32 %s98, 1
          %s319 = smul.addr %s318, 8
          %s320 = scalar_lea.vmem [#allocation7], %s319
          %321 = dma.done %s317, 128
        $region52: #{tpu_custom_call.1} parent=47 // pred_fallthru
          _
      $region48: #{tpu_custom_call.1} parent=5 // pred_fallthru
        _
    $region6: #{tpu_custom_call.1} parent=1 // loop_footer
      %s20 = sadd.s32 1, %s16
    $region7: #{tpu_custom_call.1} parent=1 // loop_footer_branch
      %15 = sbr.rel target = $region3
    $region8: #{tpu_custom_call.1} parent=1 // loop_exit
      _
    %322 = vsyncpa [#allocation3], 1
    %s323 = scalar_lea.sflag [#allocation3], 1
    %324 = vsyncpa %s323, 1
    %325 = vsyncpa [#allocation6], 1
    %326 = vsyncpa [#allocation4], 1
    %s327 = scalar_lea.sflag [#allocation4], 1
    %328 = vsyncpa %s327, 1

// kernel: tpu_custom_call.1
$region0: #{tpu_custom_call.1}
  #allocation0 [shape = 'u32[]', space=smem, size = 0x4, offset = 0x4, fixed_abs, tag = 'smem constant byte address 0x4 - core index']
  #allocation1 [shape = 'u32[144,128]{1,0:T(1,128)}', space=vmem, size = 0x12000, scoped, tag = 'internal scratch']
  %s0 = inlined_call_operand.hbm [shape: f32[16,32], index: 0, kind: input, shape index: {}]
  %s1 = inlined_call_operand.hbm [shape: bf16[32,64], index: 1, kind: input, shape index: {}]
  %s2 = inlined_call_operand.vmem [shape: f32[1,64], index: 2, kind: input, shape index: {}]
  %s3 = inlined_call_operand.hbm [shape: f32[16,32], index: 3, kind: output, shape index: {}]
  %s4 = sld [smem:[#allocation0]]
  $region53: #{tpu_custom_call.1} parent=0
    _
  %s6 = ssub.s32 1, %s4
  %s7 = scalar_select 0, %s6, %s4
  $region1: #{tpu_custom_call.1} parent=0
    #allocation2 [shape = 'u8[8192]{0}', space=vmem, size = 0x2000, scoped, tag = 'input window, operand 0']
    #allocation3 [shape = 's32[2]{0}', space=sflag, size = 0x8, scoped, tag = 'scoped memory for tpu_custom_call.1']
    #allocation4 [shape = 's32[2]{0}', space=sflag, size = 0x8, scoped, tag = 'scoped memory for tpu_custom_call.1']
    #allocation5 [shape = 'u8[8192]{0}', space=vmem, size = 0x2000, scoped, tag = 'input window, operand 1, single buffered']
    #allocation6 [shape = 's32[1]{0}', space=sflag, size = 0x4, scoped, tag = 'scoped memory for tpu_custom_call.1']
    #allocation7 [shape = 'u8[8192]{0}', space=vmem, size = 0x2000, scoped, tag = 'output window, operand 0']
    %8 = vsyncpa [#allocation3], 0
    %s9 = scalar_lea.sflag [#allocation3], 1
    %10 = vsyncpa %s9, 0
    %11 = vsyncpa [#allocation6], 0
    %12 = vsyncpa [#allocation4], 0
    %s13 = scalar_lea.sflag [#allocation4], 1
    %14 = vsyncpa %s13, 0
    loop: start=0, step=1, limit=4
    $region2: #{tpu_custom_call.1} parent=1 // loop_pre_header
      _
    $region3: #{tpu_custom_call.1} parent=1 // loop_header
      %s16 = sphi 0, %s20
      %p17 = scmp.ge.s32.totalorder %s16, 4
      %s26 = sphi 0, %s28
      %s29 = sphi 0, %s26
      %s30 = sphi 0, %s29
      %s46 = sphi 0, %s30
      %s50 = sphi 0, %s50
      %s52 = sphi 0, %s50
      %s53 = sphi 0, %s52
      %s67 = sphi 0, %s53
      %s71 = sphi 0, %s71
      %s73 = sphi 0, %s71
      %s74 = sphi 0, %s73
      %s88 = sphi 0, %s74
      %s94 = sphi 0, %s96
      %s97 = sphi 0, %s94
      %s98 = sphi 0, %s97
      %s114 = sphi 0, %s98
    $region4: #{tpu_custom_call.1} parent=1 // loop_header_branch
      %19 = sbr.rel (%p17) target = $region8
    $region5: #{tpu_custom_call.1} parent=1 // loop_body
      %s21 = ssub.s32 %s16, 1
      %s22 = ssub.s32 %s16, 2
      %s23 = sadd.s32 %s16, 1
      %s24 = ssub.s32 %s16, %s23
      %p25 = scmp.eq.s32.totalorder %s24, 0
      %s27 = sadd.s32 %s26, 1
      %s28 = scalar_select %p25, %s26, %s27
      %p31 = pneg %p25
      %p32 = scmp.eq.s32.totalorder %s16, 1
      %p33 = por %p31, %p32
      %p34 = scmp.ne.s32.totalorder %s26, %s29
      %p35 = scmp.eq.s32.totalorder %s16, 0
      %p36 = por %p34, %p35
      %p37 = scmp.ne.s32.totalorder %s26, %s29
      %p38 = scmp.eq.s32.totalorder %s21, 1
      %p39 = por %p37, %p38
      %p40 = scmp.ne.s32.totalorder %s29, %s30
      %p41 = scmp.eq.s32.totalorder %s21, 0
      %p42 = por %p40, %p41
      %p43 = scmp.ne.s32.totalorder %s29, %s30
      %p44 = scmp.eq.s32.totalorder %s22, 1
      %p45 = por %p43, %p44
      %p47 = scmp.ne.s32.totalorder %s30, %s46
      %p48 = scmp.eq.s32.totalorder %s22, 0
      %p49 = por %p47, %p48
      %s51 = sadd.s32 %s50, 1
      %p54 = scmp.eq.s32.totalorder %s16, 1
      %p55 = scmp.ne.s32.totalorder %s50, %s52
      %p56 = scmp.eq.s32.totalorder %s16, 0
      %p57 = por %p55, %p56
      %p58 = scmp.ne.s32.totalorder %s50, %s52
      %p59 = scmp.eq.s32.totalorder %s21, 1
      %p60 = por %p58, %p59
      %p61 = scmp.ne.s32.totalorder %s52, %s53
      %p62 = scmp.eq.s32.totalorder %s21, 0
      %p63 = por %p61, %p62
      %p64 = scmp.ne.s32.totalorder %s52, %s53
      %p65 = scmp.eq.s32.totalorder %s22, 1
      %p66 = por %p64, %p65
      %p68 = scmp.ne.s32.totalorder %s53, %s67
      %p69 = scmp.eq.s32.totalorder %s22, 0
      %p70 = por %p68, %p69
      %s72 = sadd.s32 %s71, 1
      %p75 = scmp.eq.s32.totalorder %s16, 1
      %p76 = scmp.ne.s32.totalorder %s71, %s73
      %p77 = scmp.eq.s32.totalorder %s16, 0
      %p78 = por %p76, %p77
      %p79 = scmp.ne.s32.totalorder %s71, %s73
      %p80 = scmp.eq.s32.totalorder %s21, 1
      %p81 = por %p79, %p80
      %p82 = scmp.ne.s32.totalorder %s73, %s74
      %p83 = scmp.eq.s32.totalorder %s21, 0
      %p84 = por %p82, %p83
      %p85 = scmp.ne.s32.totalorder %s73, %s74
      %p86 = scmp.eq.s32.totalorder %s22, 1
      %p87 = por %p85, %p86
      %p89 = scmp.ne.s32.totalorder %s74, %s88
      %p90 = scmp.eq.s32.totalorder %s22, 0
      %p91 = por %p89, %p90
      %s92 = ssub.s32 %s16, %s23
      %p93 = scmp.eq.s32.totalorder %s92, 0
      %s95 = sadd.s32 %s94, 1
      %s96 = scalar_select %p93, %s94, %s95
      %p99 = pneg %p93
      %p100 = scmp.eq.s32.totalorder %s16, 1
      %p101 = por %p99, %p100
      %p102 = scmp.ne.s32.totalorder %s94, %s97
      %p103 = scmp.eq.s32.totalorder %s16, 0
      %p104 = por %p102, %p103
      %p105 = scmp.ne.s32.totalorder %s94, %s97
      %p106 = scmp.eq.s32.totalorder %s21, 1
      %p107 = por %p105, %p106
      %p108 = scmp.ne.s32.totalorder %s97, %s98
      %p109 = scmp.eq.s32.totalorder %s21, 0
      %p110 = por %p108, %p109
      %p111 = scmp.ne.s32.totalorder %s97, %s98
      %p112 = scmp.eq.s32.totalorder %s22, 1
      %p113 = por %p111, %p112
      %p115 = scmp.ne.s32.totalorder %s98, %s114
      %p116 = scmp.eq.s32.totalorder %s22, 0
      %p117 = por %p115, %p116
      %p118 = scmp.le.s32.totalorder 1, %s16
      %p119 = scmp.lt.s32.totalorder %s16, 3
      %p120 = pnand %p118, %p119
      %p121 = pneg %p120
      // Predicated region
      $region9: #{tpu_custom_call.1} parent=5 // pred_check
        _
      $region10: #{tpu_custom_call.1} parent=5 // pred_check_branch
        %123 = sbr.rel (%p120) target = $region12
      $region11: #{tpu_custom_call.1} parent=5 // pred_region
        %s124 = ssub.s32 %s16, 1
        // Predicated region
        $region13: #{tpu_custom_call.1} parent=11 // pred_check
          %p125 = pneg %p63
        $region14: #{tpu_custom_call.1} parent=11 // pred_check_branch
          %127 = sbr.rel (%p125) target = $region16
        $region15: #{tpu_custom_call.1} parent=11 // pred_region
          %s129 = ssub.s32 256, 256
          %130 = vsyncadd [#allocation6], %s129
          %s131 = sshll.u32 [#allocation5], 4
          %s132 = int_to_ptr.vmem [resolvable:$true] %s131
          %137 = dma.hbm_to_vmem [thread:$0]  %s1, 256, %s132, [#allocation6], 64, 64, 4
        $region16: #{tpu_custom_call.1} parent=11 // pred_fallthru
          _
        // Predicated region
        $region17: #{tpu_custom_call.1} parent=11 // pred_check
          %p138 = pneg %p84
        $region18: #{tpu_custom_call.1} parent=11 // pred_check_branch
          %140 = sbr.rel (%p138) target = $region20
        $region19: #{tpu_custom_call.1} parent=11 // pred_region
          _
        $region20: #{tpu_custom_call.1} parent=11 // pred_fallthru
          _
      $region12: #{tpu_custom_call.1} parent=5 // pred_fallthru
        _
      %p141 = scmp.lt.s32.totalorder %s16, 2
      // Predicated region
      $region21: #{tpu_custom_call.1} parent=5 // pred_check
        %p142 = pneg %p141
      $region22: #{tpu_custom_call.1} parent=5 // pred_check_branch
        %144 = sbr.rel (%p142) target = $region24
      $region23: #{tpu_custom_call.1} parent=5 // pred_region
        // Predicated region
        $region25: #{tpu_custom_call.1} parent=23 // pred_check
          %p145 = pneg %p36
        $region26: #{tpu_custom_call.1} parent=23 // pred_check_branch
          %147 = sbr.rel (%p145) target = $region28
        $region27: #{tpu_custom_call.1} parent=23 // pred_region
          %s148 = sand.u32 %s26, 1
          %s149 = scalar_lea.sflag [#allocation3], %s148
          %s150 = sand.u32 %s26, 1
          %s151 = smul.addr %s150, 8
          %s152 = scalar_lea.vmem [#allocation2], %s151
          %s154 = ssub.s32 128, 128
          %155 = vsyncadd %s149, %s154
          %s156 = smul.addr %s16, 128
          %s157 = scalar_lea.hbm %s0, %s156
          %s159 = sshll.u32 %s152, 4
          %s160 = int_to_ptr.vmem [resolvable:$true] %s159
          %162 = dma.hbm_to_vmem [thread:$0]  %s157, 128, %s160, %s149
        $region28: #{tpu_custom_call.1} parent=23 // pred_fallthru
          _
      $region24: #{tpu_custom_call.1} parent=5 // pred_fallthru
        _
      %p163 = scmp.le.s32.totalorder 1, %s16
      %p164 = scmp.lt.s32.totalorder %s16, 3
      %p165 = pnand %p163, %p164
      %p166 = pneg %p165
      // Predicated region
      $region29: #{tpu_custom_call.1} parent=5 // pred_check
        _
      $region30: #{tpu_custom_call.1} parent=5 // pred_check_branch
        %168 = sbr.rel (%p165) target = $region32
      $region31: #{tpu_custom_call.1} parent=5 // pred_region
        %s169 = ssub.s32 %s16, 1
        %s170 = sand.u32 %s29, 1
        %s171 = scalar_lea.sflag [#allocation3], %s170
        %s172 = sand.u32 %s29, 1
        %s173 = smul.addr %s172, 8
        %s174 = scalar_lea.vmem [#allocation2], %s173
        // Predicated region
        $region33: #{tpu_custom_call.1} parent=31 // pred_check
          %p175 = pneg %p42
        $region34: #{tpu_custom_call.1} parent=31 // pred_check_branch
          %177 = sbr.rel (%p175) target = $region36
        $region35: #{tpu_custom_call.1} parent=31 // pred_region
          %178 = dma.done %s171, 128
        $region36: #{tpu_custom_call.1} parent=31 // pred_fallthru
          _
        // Predicated region
        $region37: #{tpu_custom_call.1} parent=31 // pred_check
          %p179 = pneg %p63
        $region38: #{tpu_custom_call.1} parent=31 // pred_check_branch
          %181 = sbr.rel (%p179) target = $region40
        $region39: #{tpu_custom_call.1} parent=31 // pred_region
          %182 = dma.done [#allocation6], 256
        $region40: #{tpu_custom_call.1} parent=31 // pred_fallthru
          _
        %s183 = sand.u32 %s29, 1
        %s184 = scalar_lea.sflag [#allocation3], %s183
        %s185 = sand.u32 %s29, 1
        %s186 = smul.addr %s185, 8
        %s187 = scalar_lea.vmem [#allocation2], %s186
        %p188 = pneg %p42
        %p189 = pneg %p39
        %p190 = pneg %p63
        %p191 = pneg %p60
        %p192 = pneg %p84
        %p193 = pneg %p81
        %p194 = pneg %p110
        %p195 = pneg %p107
        %s196 = sand.u32 %s97, 1
        %s197 = scalar_lea.sflag [#allocation4], %s196
        %s198 = sand.u32 %s97, 1
        %s199 = smul.addr %s198, 8
        %s200 = scalar_lea.vmem [#allocation7], %s199
        %v202 = vld [vmem:[%s174] sm:$0xff]
        %v203 = vpack.c.bf16 %v202, %v202
        %v204 = vld [vmem:[#allocation5] sm:$0xf]
        %v205 = vld [vmem:[#allocation5 + $0x4] sm:$0xf]
        %v206 = vld [vmem:[#allocation5 + $0x8] sm:$0xf]
        %v207 = vld [vmem:[#allocation5 + $0xc] sm:$0xf]
        %v208 = vld [vmem:[%s2] sm:$0x1]
        %v210 = vlaneseq
        %v211 = vshrl.u32 %v210, 7
        %v212 = vsub.s32 0, %v211
        %v213 = vrot.slane %v208, %v212
        %v219 = vunpack.c.l.b16 %v204
        %v220 = vunpack.c.l.b16 %v205
        %v221 = vunpack.c.l.b16 %v206
        %v222 = vunpack.c.l.b16 %v207
        %v223 = vpack.c.b16 %v220, %v219
        %v224 = vpack.c.b16 %v222, %v221
        %vm227 = vcmask 261120
        %v229 = vsel %vm227, %v203, 0
        %231 = vmatprep.subr.bf16.mxu0 0
        %232 = vmatpush1.bf16.msra.mxu0 0
        %233 = vmatprep.subr.bf16.mxu0 0
        %234 = vmatpush1.bf16.msra.mxu0 0
        %235 = vmatprep.subr.bf16.mxu0 0
        %236 = vmatpush1.bf16.msra.mxu0 0
        %237 = vmatprep.subr.bf16.mxu0 0
        %238 = vmatpush1.bf16.msra.mxu0 0
        %239 = vmatprep.subr.bf16.mxu0 0
        %240 = vmatpush1.bf16.msra.mxu0 0
        %241 = vmatprep.subr.bf16.mxu0 0
        %242 = vmatpush1.bf16.msra.mxu0 0
        %243 = vmatprep.subr.bf16.mxu0 0
        %244 = vmatpush1.bf16.msra.mxu0 %v224
        %245 = vmatprep.subr.bf16.mxu0 0
        %246 = vmatpush1.bf16.msra.mxu0 %v223
        %247 = vmatprep.subr.bf16.mxu0 0
        %248 = vmatpush2.bf16.msra.mxu0 0
        %249 = vmatprep.subr.bf16.mxu0 0
        %250 = vmatpush2.bf16.msra.mxu0 0
        %251 = vmatprep.subr.bf16.mxu0 0
        %252 = vmatpush2.bf16.msra.mxu0 0
        %253 = vmatprep.subr.bf16.mxu0 0
        %254 = vmatpush2.bf16.msra.mxu0 0
        %255 = vmatprep.subr.bf16.mxu0 0
        %256 = vmatpush2.bf16.msra.mxu0 0
        %257 = vmatprep.subr.bf16.mxu0 0
        %258 = vmatpush2.bf16.msra.mxu0 0
        %259 = vmatprep.subr.bf16.mxu0 0
        %260 = vmatpush2.bf16.msra.mxu0 0
        %261 = vmatprep.subr.bf16.mxu0 0
        %262 = vmatpush2.bf16.msra.mxu0 0
        %263 = vmatprep.mubr.bf16.mxu0 0
        %264 = vmatmul.mubr.bf16.gmra.mxu0 %v229
        %v265 = vpop.f32.mrf.mxu0
        %v266 = vadd.f32 %v213, %v265
        %v267 = vpop.f32.mrf.mxu0
        %v268 = vpop.f32.mrf.mxu0
        %v269 = vpop.f32.mrf.mxu0
        %270 = vdwg.mxu0
        %v271 = vmax.f32 %v266, 0.0
        %v272 = vxor.u32 %v266, 2147483648
        %v273 = vmul.f32 %v272, 1.442695
        %v274 = vpow.pop %v273
        %v275 = vadd.f32 %v274, 1.0
        %v276 = vrcp.pop %v275
        %v277 = vmul.f32 1.0, %v276
        %v278 = vsub.f32 %v271, %v202
        %280 = vrot.lane.b32.xlu0 %v278, 32
        %v281 = vpop.permute.xlu0 %280
        %v283 = vmul.f32 %v277, %v281
        %285 = vrot.lane.b32.xlu0 %v283, 96
        %v286 = vpop.permute.xlu0 %285
        %v288 = vadd.f32 %v202, %v286
        %289 = vst.msk [vmem:[%s200] sm:$0xff] %vm227, %v288
        %s290 = sand.u32 %s97, 1
        %s291 = scalar_lea.sflag [#allocation4], %s290
        %s292 = sand.u32 %s97, 1
        %s293 = smul.addr %s292, 8
        %s294 = scalar_lea.vmem [#allocation7], %s293
        // Predicated region
        $region41: #{tpu_custom_call.1} parent=31 // pred_check
          %p295 = pneg %p107
        $region42: #{tpu_custom_call.1} parent=31 // pred_check_branch
          %297 = sbr.rel (%p295) target = $region44
        $region43: #{tpu_custom_call.1} parent=31 // pred_region
          %s299 = ssub.s32 128, 128
          %300 = vsyncadd %s291, %s299
          %s301 = smul.addr %s21, 128
          %s302 = scalar_lea.hbm %s3, %s301
          %s304 = sshll.u32 %s294, 4
          %s305 = int_to_ptr.vmem [resolvable:$true] %s304
          %307 = dma.vmem_to_hbm [thread:$0]  %s305, 128, %s302, %s291
        $region44: #{tpu_custom_call.1} parent=31 // pred_fallthru
          _
      $region32: #{tpu_custom_call.1} parent=5 // pred_fallthru
        _
      %p308 = scmp.le.s32.totalorder 2, %s16
      // Predicated region
      $region45: #{tpu_custom_call.1} parent=5 // pred_check
        %p309 = pneg %p308
      $region46: #{tpu_custom_call.1} parent=5 // pred_check_branch
        %311 = sbr.rel (%p309) target = $region48
      $region47: #{tpu_custom_call.1} parent=5 // pred_region
        %s312 = ssub.s32 %s16, 2
        // Predicated region
        $region49: #{tpu_custom_call.1} parent=47 // pred_check
          %p313 = pneg %p113
        $region50: #{tpu_custom_call.1} parent=47 // pred_check_branch
          %315 = sbr.rel (%p313) target = $region52
        $region51: #{tpu_custom_call.1} parent=47 // pred_region
          %s316 = sand.u32 %s98, 1
          %s317 = scalar_lea.sflag [#allocation4], %s316
          %s318 = sand.u32 %s98, 1
          %s319 = smul.addr %s318, 8
          %s320 = scalar_lea.vmem [#allocation7], %s319
          %321 = dma.done %s317, 128
        $region52: #{tpu_custom_call.1} parent=47 // pred_fallthru
          _
      $region48: #{tpu_custom_call.1} parent=5 // pred_fallthru
        _
    $region6: #{tpu_custom_call.1} parent=1 // loop_footer
      %s20 = sadd.s32 1, %s16
    $region7: #{tpu_custom_call.1} parent=1 // loop_footer_branch
      %15 = sbr.rel target = $region3
    $region8: #{tpu_custom_call.1} parent=1 // loop_exit
      _
    %322 = vsyncpa [#allocation3], 1
    %s323 = scalar_lea.sflag [#allocation3], 1
    %324 = vsyncpa %s323, 1
    %325 = vsyncpa [#allocation6], 1
    %326 = vsyncpa [#allocation4], 1
    %s327 = scalar_lea.sflag [#allocation4], 1
    %328 = vsyncpa %s327, 1

</llo_original>
